<compile_context>
chip_gen: v5e
topology: v5e:2x2
jax: 0.10.0
libtpu: 0.0.40
codegen_flags: <defaults>
</compile_context>

<pallas_src>
import jax
import jax.numpy as jnp
from jax.experimental import pallas as pl
from jax.experimental.pallas import tpu as pltpu


def _device_kind():
    try:
        return jax.devices()[0].device_kind.lower()
    except Exception:
        return ""


def _make_kernel(num_chunks, matmul_dtype, act_dtype):
    """Build the per-tile kernel.

    h_ref   : (TB, E) native-dtype hidden tile (tiled over the batch grid axis)
    w1t_ref : (E, E)  bf16  0.5 * linear1.weight.T (resident across the grid)
    b1_ref  : (1, E)  f32   0.5 * linear1.bias
    w2_ref  : (1, E)  f32   0.5 * linear2.weight (native layout, no transpose)
    b2_ref  : (1, 1)  f32   linear2.bias + 0.5*sum(linear2.weight)  (SMEM)
    out_ref : (TB, 1) f32   rating column for this tile
    """

    def kernel(h_ref, w1t_ref, b1_ref, w2_ref, b2_ref, out_ref):
        tb = h_ref.shape[0]
        chunk = tb // num_chunks
        # Two independent sub-chunks: the LLO scheduler interleaves chunk
        # k+1's MXU pushes with chunk k's EUP/VPU/XLU epilogue.
        for c in range(num_chunks):
            rows = pl.ds(c * chunk, chunk)
            hs = h_ref[rows, :].astype(matmul_dtype)        # in-kernel cast
            # u = 0.5 * (hidden @ w1.T + b1): the 0.5 is pre-folded into w1t/b1.
            u = jnp.dot(hs, w1t_ref[...],
                        preferred_element_type=jnp.float32) + b1_ref[...]
            # sigmoid(z) == 0.5*tanh(0.5*z) + 0.5  -> single EUP transcendental.
            t = jnp.tanh(u.astype(act_dtype)).astype(jnp.float32)
            # Layer 2 (N == 1): VPU multiply + lane reduction, not the MXU.
            r = jnp.sum(t * w2_ref[...], axis=-1, keepdims=True) + b2_ref[0, 0]
            out_ref[rows, :] = r.astype(out_ref.dtype)

    return kernel


def prepare_peter_mlp_params(w1, b1, w2, b2, *, matmul_dtype=jnp.bfloat16):
    """One-time parameter prep (hoisted out of the per-call forward).

    w1: (E, E) PyTorch layout (out, in); b1: (E,); w2: (1, E); b2: (1,).

    Folds sigmoid(u) = 0.5*tanh(0.5*u) + 0.5 into the parameters:
      rating = (0.5*w2) . tanh(h @ (0.5*w1.T) + 0.5*b1) + (b2 + 0.5*sum(w2))
    so the kernel issues exactly one tanh per element.
    """
    E = w1.shape[0]
    w1 = jnp.asarray(w1, jnp.float32)
    b1 = jnp.asarray(b1, jnp.float32)
    w2 = jnp.asarray(w2, jnp.float32)
    b2 = jnp.asarray(b2, jnp.float32)
    w1t_half = (0.5 * w1.T).astype(matmul_dtype)          # (E, E)
    b1_half = (0.5 * b1).reshape(1, E)                    # (1, E) f32
    w2_half = (0.5 * w2).reshape(1, E)                    # (1, E) f32, native layout
    b2_eff = (b2.reshape(()) + 0.5 * jnp.sum(w2)).reshape(1, 1)  # (1, 1) f32
    return w1t_half, b1_half, w2_half, b2_eff


def peter_mlp_forward(hidden, params, *, batch_tile=1024):
    """hidden: (B, E) any float dtype. params from prepare_peter_mlp_params().
    Returns rating of shape (B,)."""
    w1t, b1h, w2h, b2e = params
    B, E = hidden.shape
    matmul_dtype = w1t.dtype
    kind = _device_kind()

    # Batch tiling: single full block for small batches; otherwise big tiles
    # to amortize the fixed per-grid-step cost.  On v7x prefer an even grid so
    # the "parallel" batch axis balances across the two TensorCores.
    if B <= batch_tile:
        tb = B
    else:
        tb = batch_tile
        if ("v7" in kind and pl.cdiv(B, tb) % 2 == 1 and tb % 2 == 0
                and tb // 2 >= 512 and pl.cdiv(B, tb // 2) % 2 == 0):
            tb //= 2
    num_tiles = pl.cdiv(B, tb)

    # 2-way in-kernel sub-chunking only pays off for large tiles.
    num_chunks = 2 if (tb >= 512 and tb % 16 == 0) else 1

    # bf16 transcendentals only where the EUP supports them (v6e/v7x);
    # v5e (and unknown chips) keep the tanh in f32.
    act_dtype = jnp.bfloat16 if ("v6" in kind or "v7" in kind) else jnp.float32

    h_item = jnp.dtype(hidden.dtype).itemsize
    w_item = jnp.dtype(matmul_dtype).itemsize
    cost = pl.CostEstimate(
        flops=2 * B * E * E + 4 * B * E,
        transcendentals=B * E,                          # one tanh per element
        bytes_accessed=(B * E * h_item + E * E * w_item
                        + 4 * (2 * E + 1 + B)),
    )

    # VMEM budget: double-buffered hidden tiles + resident weights + f32
    # intermediates, with headroom; capped per generation (v7x: 64 MiB VMEM).
    resident = 2 * (E * E * w_item + 2 * E * 4)
    est = (2 * tb * E * h_item + resident + 2 * tb * 4
           + 4 * (tb // num_chunks) * E * 4)
    cap = (48 << 20) if "v7" in kind else (64 << 20)
    vmem_limit = int(min(cap, max(32 << 20, 2 * est)))

    kernel = _make_kernel(num_chunks, matmul_dtype, act_dtype)

    out = pl.pallas_call(
        kernel,
        out_shape=jax.ShapeDtypeStruct((B, 1), jnp.float32),
        grid=(num_tiles,),
        in_specs=[
            pl.BlockSpec((tb, E), lambda i: (i, 0)),            # hidden: tiled over B
            pl.BlockSpec((E, E), lambda i: (0, 0)),             # w1t: resident
            pl.BlockSpec((1, E), lambda i: (0, 0)),             # b1:  resident
            pl.BlockSpec((1, E), lambda i: (0, 0)),             # w2:  resident
            pl.BlockSpec(memory_space=pltpu.MemorySpace.SMEM),  # b2 scalar
        ],
        out_specs=pl.BlockSpec((tb, 1), lambda i: (i, 0)),
        compiler_params=pltpu.CompilerParams(
            dimension_semantics=("parallel",),   # v7x: shard batch over 2 TCs
            vmem_limit_bytes=vmem_limit,
        ),
        cost_estimate=cost,
    )(hidden, w1t, b1h, w2h, b2e)

    return out[:, 0]                                    # rating.view(-1)


def init_peter_mlp_params(key, emsize):
    """Matches PETER_MLP.init_weights(): uniform(-0.1, 0.1) weights, zero biases."""
    initrange = 0.1
    k1, k2 = jax.random.split(key)
    w1 = jax.random.uniform(k1, (emsize, emsize), jnp.float32,
                            minval=-initrange, maxval=initrange)
    b1 = jnp.zeros((emsize,), jnp.float32)
    w2 = jax.random.uniform(k2, (1, emsize), jnp.float32,
                            minval=-initrange, maxval=initrange)
    b2 = jnp.zeros((1,), jnp.float32)
    return w1, b1, w2, b2


def _reference(hidden, w1, b1, w2, b2):
    return (jax.nn.sigmoid(hidden @ w1.T + b1) @ w2.T + b2).reshape(-1)


if __name__ == "__main__":
    key = jax.random.PRNGKey(0)
    k_h, k_h2, k_p = jax.random.split(key, 3)

    E = 128                       # small stand-in for the module's emsize=512
    w1, b1, w2, b2 = init_peter_mlp_params(k_p, E)
    params = prepare_peter_mlp_params(w1, b1, w2, b2)   # bf16 matmul weights

    # Small batch: single grid step, block == full array.
    B = 8
    hidden = jax.random.normal(k_h, (B, E), jnp.float32)
    rating = jax.block_until_ready(peter_mlp_forward(hidden, params))
    ref = _reference(hidden, w1, b1, w2, b2)
    assert rating.shape == (B,)
    assert jnp.allclose(rating, ref, atol=5e-2, rtol=5e-2), (
        float(jnp.max(jnp.abs(rating - ref))))

    # Larger, non-multiple batch: tiled path with a ragged (masked) last block.
    B2 = 1032
    hidden2 = jax.random.normal(k_h2, (B2, E), jnp.float32)
    rating2 = jax.block_until_ready(peter_mlp_forward(hidden2, params))
    ref2 = _reference(hidden2, w1, b1, w2, b2)
    assert rating2.shape == (B2,)
    assert jnp.allclose(rating2, ref2, atol=5e-2, rtol=5e-2), (
        float(jnp.max(jnp.abs(rating2 - ref2))))

    print("KERNEL_OK")
</pallas_src>

<mosaic_0001>
module attributes {stable_mosaic.version = 11 : i64} {
  func.func @kernel(%arg0: i32, %arg1: memref<8x128xf32, #tpu.memory_space<vmem>>, %arg2: memref<128x128xbf16, #tpu.memory_space<vmem>>, %arg3: memref<1x128xf32, #tpu.memory_space<vmem>>, %arg4: memref<1x128xf32, #tpu.memory_space<vmem>>, %arg5: memref<1x1xf32, #tpu.memory_space<smem>>, %arg6: memref<8x1xf32, #tpu.memory_space<vmem>>) attributes {dimension_semantics = [#tpu.dimension_semantics<parallel>], iteration_bounds = array<i64: 1>, scalar_prefetch = 0 : i64, scratch_operands = 0 : i64, tpu.core_type = #tpu.core_type<tc>, window_params = [{transform_indices = @transform_0, window_bounds = array<i64: 8, 128>}, {pipeline_mode = #tpu.pipeline_mode<synchronous>, transform_indices = @transform_1, window_bounds = array<i64: 128, 128>}, {pipeline_mode = #tpu.pipeline_mode<synchronous>, transform_indices = @transform_2, window_bounds = array<i64: 1, 128>}, {pipeline_mode = #tpu.pipeline_mode<synchronous>, transform_indices = @transform_3, window_bounds = array<i64: 1, 128>}, {transform_indices = @transform_4, window_bounds = array<i64: 1, 1>}, {transform_indices = @transform_5, window_bounds = array<i64: 8, 1>}]} {
    %c0 = arith.constant 0 : index
    %c0_0 = arith.constant 0 : index
    %0 = vector.load %arg1[%c0, %c0_0] : memref<8x128xf32, #tpu.memory_space<vmem>>, vector<8x128xf32>
    %1 = arith.truncf %0 : vector<8x128xf32> to vector<8x128xbf16>
    %c0_1 = arith.constant 0 : index
    %c0_2 = arith.constant 0 : index
    %2 = vector.load %arg2[%c0_1, %c0_2] : memref<128x128xbf16, #tpu.memory_space<vmem>>, vector<128x128xbf16>
    %cst = arith.constant dense<0.000000e+00> : vector<8x128xf32>
    %3 = tpu.matmul %1, %2, %cst {dimension_numbers = #tpu.dot_dimension_numbers<[1], [0], [0], [1], [0, 0, 1, 1], [], []>} : vector<8x128xbf16>, vector<128x128xbf16>, vector<8x128xf32> -> vector<8x128xf32>
    %c0_3 = arith.constant 0 : index
    %c0_4 = arith.constant 0 : index
    %4 = vector.load %arg3[%c0_3, %c0_4] : memref<1x128xf32, #tpu.memory_space<vmem>>, vector<1x128xf32>
    %5 = vector.broadcast %4 : vector<1x128xf32> to vector<8x128xf32>
    %6 = arith.addf %3, %5 : vector<8x128xf32>
    %7 = math.tanh %6 : vector<8x128xf32>
    %c0_5 = arith.constant 0 : index
    %c0_6 = arith.constant 0 : index
    %8 = vector.load %arg4[%c0_5, %c0_6] : memref<1x128xf32, #tpu.memory_space<vmem>>, vector<1x128xf32>
    %9 = vector.broadcast %8 : vector<1x128xf32> to vector<8x128xf32>
    %10 = arith.mulf %7, %9 : vector<8x128xf32>
    %cst_7 = arith.constant dense<0.000000e+00> : vector<8xf32>
    %11 = vector.multi_reduction <add>, %10, %cst_7 [1] : vector<8x128xf32> to vector<8xf32>
    %12 = vector.shape_cast %11 : vector<8xf32> to vector<8x1xf32>
    %c0_8 = arith.constant 0 : index
    %c0_9 = arith.constant 0 : index
    %13 = memref.load %arg5[%c0_8, %c0_9] : memref<1x1xf32, #tpu.memory_space<smem>>
    %14 = vector.broadcast %13 : f32 to vector<8x1xf32>
    %15 = arith.addf %12, %14 : vector<8x1xf32>
    %c0_10 = arith.constant 0 : index
    %c0_11 = arith.constant 0 : index
    %16 = vector.load %arg6[%c0_10, %c0_11] : memref<8x1xf32, #tpu.memory_space<vmem>>, vector<8x1xf32>
    tpu.vector_store %arg6[%c0_10, %c0_11], %15 {strides = array<i32>} : memref<8x1xf32, #tpu.memory_space<vmem>>, vector<8x1xf32>,
    return
  }
  func.func @transform_0(%arg0: i32) -> (i32, i32) {
    %c0_i32 = arith.constant 0 : i32
    %c0_i32_0 = arith.constant 0 : i32
    return %arg0, %c0_i32 : i32, i32
  }
  func.func @transform_1(%arg0: i32) -> (i32, i32) {
    %c0_i32 = arith.constant 0 : i32
    %c0_i32_0 = arith.constant 0 : i32
    %c0_i32_1 = arith.constant 0 : i32
    return %c0_i32, %c0_i32_0 : i32, i32
  }
  func.func @transform_2(%arg0: i32) -> (i32, i32) {
    %c0_i32 = arith.constant 0 : i32
    %c0_i32_0 = arith.constant 0 : i32
    %c0_i32_1 = arith.constant 0 : i32
    return %c0_i32, %c0_i32_0 : i32, i32
  }
  func.func @transform_3(%arg0: i32) -> (i32, i32) {
    %c0_i32 = arith.constant 0 : i32
    %c0_i32_0 = arith.constant 0 : i32
    %c0_i32_1 = arith.constant 0 : i32
    return %c0_i32, %c0_i32_0 : i32, i32
  }
  func.func @transform_4(%arg0: i32) -> (i32, i32) {
    %c0_i32 = arith.constant 0 : i32
    %c0_i32_0 = arith.constant 0 : i32
    %c0_i32_1 = arith.constant 0 : i32
    return %c0_i32, %c0_i32_0 : i32, i32
  }
  func.func @transform_5(%arg0: i32) -> (i32, i32) {
    %c0_i32 = arith.constant 0 : i32
    %c0_i32_0 = arith.constant 0 : i32
    return %arg0, %c0_i32 : i32, i32
  }
}

</mosaic_0001>

<llo_original>
// kernel: tpu_custom_call.1
$region0: #{tpu_custom_call.1}
  #allocation0 [shape = 'u32[]', space=smem, size = 0x4, offset = 0x4, fixed_abs, tag = 'smem constant byte address 0x4 - core index']
  #allocation1 [shape = 'u32[72,128]{1,0:T(1,128)}', space=vmem, size = 0x9000, scoped, tag = 'internal scratch']
  #allocation2 [shape = 'f32[1,1]{1,0:T(1,128)S(6)}', space=smem, size = 0x200, scoped, tag = 'scoped memory for tpu_custom_call.1']
  %s0 = inlined_call_operand.hbm [shape: f32[8,128], index: 0, kind: input, shape index: {}]
  %s1 = inlined_call_operand.hbm [shape: bf16[128,128], index: 1, kind: input, shape index: {}]
  %s2 = inlined_call_operand.vmem [shape: f32[1,128], index: 2, kind: input, shape index: {}]
  %s3 = inlined_call_operand.vmem [shape: f32[1,128], index: 3, kind: input, shape index: {}]
  %s4 = inlined_call_operand.<no memory space> [shape: f32[1,1], index: 4, kind: input, shape index: {}]
  %s5 = inlined_call_operand.vmem [shape: f32[8,1], index: 5, kind: output, shape index: {}]
  %s6 = sld [smem:[#allocation0]]
  $region38: #{tpu_custom_call.1} parent=0
    _
  %s8 = ssub.s32 1, %s6
  %s9 = scalar_select 0, %s8, %s6
  %10 = sst [smem:[#allocation2]] %s4
  $region1: #{tpu_custom_call.1} parent=0
    #allocation3 [shape = 'u8[4096]{0}', space=vmem, size = 0x1000, scoped, tag = 'input window, operand 0, single buffered']
    #allocation4 [shape = 's32[1]{0}', space=sflag, size = 0x4, scoped, tag = 'scoped memory for tpu_custom_call.1']
    #allocation5 [shape = 'u8[32768]{0}', space=vmem, size = 0x8000, scoped, tag = 'input window, operand 1, single buffered']
    #allocation6 [shape = 's32[1]{0}', space=sflag, size = 0x4, scoped, tag = 'scoped memory for tpu_custom_call.1']
    %11 = vsyncpa [#allocation4], 0
    %12 = vsyncpa [#allocation6], 0
    // Predicated region
    $region2: #{tpu_custom_call.1} parent=1 // pred_check
      _
    $region3: #{tpu_custom_call.1} parent=1 // pred_check_branch
      %14 = sbr.rel (0) target = $region5
    $region4: #{tpu_custom_call.1} parent=1 // pred_region
      %16 = vsyncadd [#allocation4], 0
      %s18 = sshll.u32 %s0, 4
      %s19 = int_to_ptr.hbm [resolvable:$true] %s18
      %s20 = sshll.u32 [#allocation3], 4
      %s21 = int_to_ptr.vmem [resolvable:$true] %s20
      %23 = dma.hbm_to_vmem [thread:$0]  %s19, 128, %s21, [#allocation4]
    $region5: #{tpu_custom_call.1} parent=1 // pred_fallthru
      _
    // Predicated region
    $region6: #{tpu_custom_call.1} parent=1 // pred_check
      _
    $region7: #{tpu_custom_call.1} parent=1 // pred_check_branch
      %25 = sbr.rel (0) target = $region9
    $region8: #{tpu_custom_call.1} parent=1 // pred_region
      %27 = vsyncadd [#allocation6], 0
      %s28 = sshll.u32 %s1, 4
      %s29 = int_to_ptr.hbm [resolvable:$true] %s28
      %s30 = sshll.u32 [#allocation5], 4
      %s31 = int_to_ptr.vmem [resolvable:$true] %s30
      %36 = dma.hbm_to_vmem [thread:$0]  %s29, 1024, %s31, [#allocation6], 64, 64, 4
    $region9: #{tpu_custom_call.1} parent=1 // pred_fallthru
      _
    // Predicated region
    $region10: #{tpu_custom_call.1} parent=1 // pred_check
      _
    $region11: #{tpu_custom_call.1} parent=1 // pred_check_branch
      %38 = sbr.rel (0) target = $region13
    $region12: #{tpu_custom_call.1} parent=1 // pred_region
      _
    $region13: #{tpu_custom_call.1} parent=1 // pred_fallthru
      _
    // Predicated region
    $region14: #{tpu_custom_call.1} parent=1 // pred_check
      _
    $region15: #{tpu_custom_call.1} parent=1 // pred_check_branch
      %40 = sbr.rel (0) target = $region17
    $region16: #{tpu_custom_call.1} parent=1 // pred_region
      _
    $region17: #{tpu_custom_call.1} parent=1 // pred_fallthru
      _
    // Predicated region
    $region18: #{tpu_custom_call.1} parent=1 // pred_check
      _
    $region19: #{tpu_custom_call.1} parent=1 // pred_check_branch
      %42 = sbr.rel (0) target = $region21
    $region20: #{tpu_custom_call.1} parent=1 // pred_region
      _
    $region21: #{tpu_custom_call.1} parent=1 // pred_fallthru
      _
    // Predicated region
    $region22: #{tpu_custom_call.1} parent=1 // pred_check
      _
    $region23: #{tpu_custom_call.1} parent=1 // pred_check_branch
      %44 = sbr.rel (0) target = $region25
    $region24: #{tpu_custom_call.1} parent=1 // pred_region
      %46 = dma.done [#allocation4], 128
    $region25: #{tpu_custom_call.1} parent=1 // pred_fallthru
      _
    // Predicated region
    $region26: #{tpu_custom_call.1} parent=1 // pred_check
      _
    $region27: #{tpu_custom_call.1} parent=1 // pred_check_branch
      %48 = sbr.rel (0) target = $region29
    $region28: #{tpu_custom_call.1} parent=1 // pred_region
      %50 = dma.done [#allocation6], 1024
    $region29: #{tpu_custom_call.1} parent=1 // pred_fallthru
      _
    %v51 = vld [vmem:[#allocation3] sm:$0xff]
    %v52 = vpack.c.bf16 %v51, %v51
    %v53 = vld [vmem:[#allocation5] sm:$0xf]
    %v54 = vld [vmem:[#allocation5 + $0x4] sm:$0xf]
    %v55 = vld [vmem:[#allocation5 + $0x8] sm:$0xf]
    %v56 = vld [vmem:[#allocation5 + $0xc] sm:$0xf]
    %v57 = vld [vmem:[#allocation5 + $0x10] sm:$0xf]
    %v58 = vld [vmem:[#allocation5 + $0x14] sm:$0xf]
    %v59 = vld [vmem:[#allocation5 + $0x18] sm:$0xf]
    %v60 = vld [vmem:[#allocation5 + $0x1c] sm:$0xf]
    %v61 = vld [vmem:[#allocation5 + $0x20] sm:$0xf]
    %v62 = vld [vmem:[#allocation5 + $0x24] sm:$0xf]
    %v63 = vld [vmem:[#allocation5 + $0x28] sm:$0xf]
    %v64 = vld [vmem:[#allocation5 + $0x2c] sm:$0xf]
    %v65 = vld [vmem:[#allocation5 + $0x30] sm:$0xf]
    %v66 = vld [vmem:[#allocation5 + $0x34] sm:$0xf]
    %v67 = vld [vmem:[#allocation5 + $0x38] sm:$0xf]
    %v68 = vld [vmem:[#allocation5 + $0x3c] sm:$0xf]
    %v69 = vld [vmem:[%s2] sm:$0x1]
    %v71 = vperm.slane %v69, 0
    %v89 = vunpack.c.l.b16 %v53
    %v90 = vunpack.c.l.b16 %v54
    %v91 = vunpack.c.l.b16 %v55
    %v92 = vunpack.c.l.b16 %v56
    %v93 = vunpack.c.l.b16 %v57
    %v94 = vunpack.c.l.b16 %v58
    %v95 = vunpack.c.l.b16 %v59
    %v96 = vunpack.c.l.b16 %v60
    %v97 = vunpack.c.l.b16 %v61
    %v98 = vunpack.c.l.b16 %v62
    %v99 = vunpack.c.l.b16 %v63
    %v100 = vunpack.c.l.b16 %v64
    %v101 = vunpack.c.l.b16 %v65
    %v102 = vunpack.c.l.b16 %v66
    %v103 = vunpack.c.l.b16 %v67
    %v104 = vunpack.c.l.b16 %v68
    %v105 = vpack.c.b16 %v90, %v89
    %v106 = vpack.c.b16 %v92, %v91
    %v107 = vpack.c.b16 %v94, %v93
    %v108 = vpack.c.b16 %v96, %v95
    %v109 = vpack.c.b16 %v98, %v97
    %v110 = vpack.c.b16 %v100, %v99
    %v111 = vpack.c.b16 %v102, %v101
    %v112 = vpack.c.b16 %v104, %v103
    %121 = vmatpush.bf16.msra.mxu0 %v112
    %122 = vmatpush.bf16.msra.mxu0 %v111
    %123 = vmatpush.bf16.msra.mxu0 %v110
    %124 = vmatpush.bf16.msra.mxu0 %v109
    %125 = vmatpush.bf16.msra.mxu0 %v108
    %126 = vmatpush.bf16.msra.mxu0 %v107
    %127 = vmatpush.bf16.msra.mxu0 %v106
    %128 = vmatpush.bf16.msra.mxu0 %v105
    %129 = vmatmul.bf16.gmra.mxu0 %v52
    %v130 = vpop.f32.mrf.mxu0
    %v131 = vadd.f32 %v71, %v130
    %v132 = vpop.f32.mrf.mxu0
    %133 = vdwg.mxu0
    %v134 = vtanh.pop %v131
    %v135 = vld [vmem:[%s3] sm:$0x1]
    %v137 = vperm.slane %v135, 0
    %v139 = vmul.f32 %v134, %v137
    %140 = vadd.xlane.f32.xlu0 %v139
    %v141 = vpop.xlane.xlu0 %140
    %s142 = sld [smem:[#allocation2]]
    %v143 = vstv %s142
    %v144 = vadd.f32 %v141, %v143
    %vm145 = vcmask 7168
    %146 = vst.msk [vmem:[%s5] sm:$0xff] %vm145, %v144
    // Predicated region
    $region30: #{tpu_custom_call.1} parent=1 // pred_check
      _
    $region31: #{tpu_custom_call.1} parent=1 // pred_check_branch
      %148 = sbr.rel (0) target = $region33
    $region32: #{tpu_custom_call.1} parent=1 // pred_region
      _
    $region33: #{tpu_custom_call.1} parent=1 // pred_fallthru
      _
    // Predicated region
    $region34: #{tpu_custom_call.1} parent=1 // pred_check
      _
    $region35: #{tpu_custom_call.1} parent=1 // pred_check_branch
      %150 = sbr.rel (0) target = $region37
    $region36: #{tpu_custom_call.1} parent=1 // pred_region
      _
    $region37: #{tpu_custom_call.1} parent=1 // pred_fallthru
      _
    %151 = vsyncpa [#allocation4], 1
    %152 = vsyncpa [#allocation6], 1

</llo_original>
